<compile_context>
chip_gen: v6e
topology: v6e:2x2x1
jax: 0.10.0
libtpu: 0.0.40
codegen_flags: <defaults>
</compile_context>

<pallas_src>
import functools

import jax
import jax.numpy as jnp
from jax import lax
from jax.experimental import pallas as pl
from jax.experimental.pallas import tpu as pltpu

# Scoped-VMEM limit: < v7x 64 MiB physical, > v5e 16 MiB default scoped limit.
_VMEM_LIMIT_BYTES = 40 * 1024 * 1024
# Working-set budget used to size the batch tile (x double-buffer + temporaries),
# leaving headroom under _VMEM_LIMIT_BYTES for weights / compiler scratch.
_PIPELINE_BUDGET_BYTES = 20 * 1024 * 1024


def _decider_kernel(x_ref, w1_ref, b1_ref, w2_ref, b2_ref, w3t_ref, b3_ref,
                    o_ref, *, approx_sigmoid):
    # ---- Layer 1: (tb, H) @ (H, 64) on the MXU, f32 accumulation
    x = x_ref[...].astype(w1_ref.dtype)
    h1 = jnp.dot(x, w1_ref[...], preferred_element_type=jnp.float32) + b1_ref[...]
    h1 = jnp.maximum(h1, 0.0)  # ReLU in f32 (VPU)

    # ---- Layer 2: (tb, 64) @ (64, 32) on the MXU, f32 accumulation
    h2 = jnp.dot(h1.astype(w2_ref.dtype), w2_ref[...],
                 preferred_element_type=jnp.float32) + b2_ref[...]
    h2 = jnp.maximum(h2, 0.0)

    # ---- Layer 3 (N=1), lane-dense: contract the 32-dim of (1,32) x (tb,32)
    # so z has shape (1, tb) with the batch on the lane axis.  The epilogue
    # (exp / reciprocal / store) then runs on dense vregs and unmasked stores.
    z = lax.dot_general(
        w3t_ref[...], h2,
        dimension_numbers=(((1,), (1,)), ((), ())),
        preferred_element_type=jnp.float32,
    ) + b3_ref[...]

    # ---- Sigmoid: exp on EUP; reciprocal on EUP (approx) or exact VALU divide
    e = jnp.exp(-z)
    if approx_sigmoid:
        o = pl.reciprocal(1.0 + e, approx=True)
    else:
        o = 1.0 / (1.0 + e)
    o_ref[...] = o.astype(o_ref.dtype)


def _pick_batch_tile(batch, hdim):
    """hdim-aware batch tile.

    Targets a large tile (amortizes the ~0.35 us per-grid-step overhead when
    hdim is small) while keeping the double-buffered x tile plus in-kernel
    temporaries inside _PIPELINE_BUDGET_BYTES (so large hdim stays inside VMEM
    on every generation), and guarantees >= 2 grid steps for batch > 16 so the
    "parallel" batch axis can be sharded across v7x's two TensorCores.
    """
    if batch <= 16:
        return batch  # single tile; block == full dim is always legal
    padded_batch = 8 * ((batch + 7) // 8)
    # Approx. VMEM bytes per batch row while the pipeline is running:
    #   2x double-buffered x (f32) + bf16 copy of x + h1 (f32 + bf16 copy)
    #   + h2 (f32) + 2x double-buffered output row (f32)
    per_row = 2 * hdim * 4 + hdim * 2 + 64 * (4 + 2) + 32 * 4 + 2 * 4
    tb = (_PIPELINE_BUDGET_BYTES // per_row) // 8 * 8
    tb = max(8, tb)
    # >= 2 grid steps whenever batch > 16 (v7x megacore sharding).
    tb = min(tb, 8 * ((batch + 15) // 16))
    return min(tb, padded_batch)


def decider_forward(hidden_encoder, params, *, precise=False):
    """hidden_encoder: (num_layers, batch, hidden_dim); mirrors the PyTorch
    module which consumes hidden_encoder[0].  Set precise=True for f32 matmul
    operands and an exact sigmoid (default uses bf16 MXU operands and an
    approximate EUP reciprocal, covered by ~2e-2 tolerance)."""
    w1, b1, w2, b2, w3, b3 = params
    num_layers, batch, hdim = hidden_encoder.shape

    tb = _pick_batch_tile(batch, hdim)
    num_tiles = pl.cdiv(batch, tb)
    grid = (num_tiles,)

    mxu_dtype = jnp.float32 if precise else jnp.bfloat16
    w1_m = w1.astype(mxu_dtype)
    w2_m = w2.astype(mxu_dtype)
    b1_2d = b1.reshape(1, -1).astype(jnp.float32)
    b2_2d = b2.reshape(1, -1).astype(jnp.float32)
    w3t = w3.reshape(1, -1).astype(jnp.float32)   # (1, 32) for the lane-dense epilogue
    b3_2d = b3.reshape(1, 1).astype(jnp.float32)

    # Constant index_map => each weight/bias is DMA'd once and stays VMEM-resident.
    def const_spec(a):
        return pl.BlockSpec(a.shape, lambda i: (0,) * a.ndim)

    kernel = functools.partial(_decider_kernel, approx_sigmoid=not precise)

    flops = 2 * batch * (hdim * 64 + 64 * 32 + 32)
    bytes_accessed = (
        batch * hdim * hidden_encoder.dtype.itemsize      # x read
        + num_tiles * tb * 4                              # output write (padded)
        + w1_m.size * w1_m.dtype.itemsize
        + w2_m.size * w2_m.dtype.itemsize
        + (b1_2d.size + b2_2d.size + w3t.size + b3_2d.size) * 4
    )

    out2d = pl.pallas_call(
        kernel,
        out_shape=jax.ShapeDtypeStruct((num_tiles, tb), jnp.float32),
        grid_spec=pltpu.PrefetchScalarGridSpec(
            num_scalar_prefetch=0,
            grid=grid,
            in_specs=[
                # Layer axis squeezed (always layer 0): kernel sees (tb, hdim),
                # read directly from the original hidden_encoder buffer.
                pl.BlockSpec((pl.Squeezed(), tb, hdim), lambda i: (0, i, 0)),
                const_spec(w1_m), const_spec(b1_2d),
                const_spec(w2_m), const_spec(b2_2d),
                const_spec(w3t), const_spec(b3_2d),
            ],
            # Lane-dense output: one (1, tb) row per grid step, unmasked stores.
            out_specs=pl.BlockSpec((1, tb), lambda i: (i, 0)),
        ),
        compiler_params=pltpu.CompilerParams(
            dimension_semantics=("parallel",),
            vmem_limit_bytes=_VMEM_LIMIT_BYTES,
        ),
        cost_estimate=pl.CostEstimate(
            flops=flops, transcendentals=batch, bytes_accessed=bytes_accessed),
    )(hidden_encoder, w1_m, b1_2d, w2_m, b2_2d, w3t, b3_2d)

    # Metadata reshape (plus a cheap slice when batch % tb != 0; padded lanes
    # may transiently hold garbage from OOB rows — they are discarded here).
    out = out2d.reshape(-1)
    if out.shape[0] != batch:
        out = out[:batch]
    return out.reshape(batch, 1)


def init_decider_params(key, hidden_encoder_dim):
    """Deterministic init matching nn.Linear default (U[-1/sqrt(fan_in), +])."""
    dims = [(hidden_encoder_dim, 64), (64, 32), (32, 1)]
    params = []
    for (fan_in, fan_out) in dims:
        key, kw, kb = jax.random.split(key, 3)
        bound = 1.0 / jnp.sqrt(fan_in)
        w = jax.random.uniform(kw, (fan_in, fan_out), jnp.float32, -bound, bound)
        b = jax.random.uniform(kb, (1, fan_out), jnp.float32, -bound, bound)
        params += [w, b]
    return tuple(params)


def _reference_forward(hidden_encoder, params):
    x = hidden_encoder[0]
    w1, b1, w2, b2, w3, b3 = params
    h1 = jnp.maximum(x @ w1 + b1, 0.0)
    h2 = jnp.maximum(h1 @ w2 + b2, 0.0)
    return jax.nn.sigmoid(h2 @ w3 + b3)


if __name__ == "__main__":
    hidden_encoder_dim = 32
    num_layers = 2  # only layer 0 is consumed; selected inside the BlockSpec

    key = jax.random.PRNGKey(0)
    key, k_params = jax.random.split(key)
    params = init_decider_params(k_params, hidden_encoder_dim)

    # batch=8 exercises the single-tile path; batch=40 exercises the
    # multi-step grid (>=2 steps) with a padded last tile.
    for batch in (8, 40):
        key, k_in = jax.random.split(key)
        hidden_encoder = jax.random.normal(
            k_in, (num_layers, batch, hidden_encoder_dim), jnp.float32)

        out = jax.block_until_ready(decider_forward(hidden_encoder, params))
        ref = _reference_forward(hidden_encoder, params)

        assert out.shape == (batch, 1)
        # Tolerance covers bf16 matmul operands (f32 accumulation) and the
        # approximate EUP reciprocal in the sigmoid (use precise=True for f32).
        assert jnp.allclose(out, ref, atol=2e-2, rtol=2e-2), (batch, out, ref)

    print("KERNEL_OK")
</pallas_src>

<mosaic_0001>
module attributes {stable_mosaic.version = 11 : i64} {
  func.func @_decider_kernel(%arg0: i32, %arg1: memref<1x8x32xf32, #tpu.memory_space<vmem>>, %arg2: memref<32x64xbf16, #tpu.memory_space<vmem>>, %arg3: memref<1x64xf32, #tpu.memory_space<vmem>>, %arg4: memref<64x32xbf16, #tpu.memory_space<vmem>>, %arg5: memref<1x32xf32, #tpu.memory_space<vmem>>, %arg6: memref<1x32xf32, #tpu.memory_space<vmem>>, %arg7: memref<1x1xf32, #tpu.memory_space<vmem>>, %arg8: memref<1x8xf32, #tpu.memory_space<vmem>>) attributes {dimension_semantics = [#tpu.dimension_semantics<parallel>], iteration_bounds = array<i64: 1>, scalar_prefetch = 0 : i64, scratch_operands = 0 : i64, tpu.core_type = #tpu.core_type<tc>, window_params = [{transform_indices = @transform_0, window_bounds = array<i64: 1, 8, 32>}, {pipeline_mode = #tpu.pipeline_mode<synchronous>, transform_indices = @transform_1, window_bounds = array<i64: 32, 64>}, {pipeline_mode = #tpu.pipeline_mode<synchronous>, transform_indices = @transform_2, window_bounds = array<i64: 1, 64>}, {pipeline_mode = #tpu.pipeline_mode<synchronous>, transform_indices = @transform_3, window_bounds = array<i64: 64, 32>}, {pipeline_mode = #tpu.pipeline_mode<synchronous>, transform_indices = @transform_4, window_bounds = array<i64: 1, 32>}, {pipeline_mode = #tpu.pipeline_mode<synchronous>, transform_indices = @transform_5, window_bounds = array<i64: 1, 32>}, {pipeline_mode = #tpu.pipeline_mode<synchronous>, transform_indices = @transform_6, window_bounds = array<i64: 1, 1>}, {transform_indices = @transform_7, window_bounds = array<i64: 1, 8>}]} {
    %c0 = arith.constant 0 : index
    %c0_0 = arith.constant 0 : index
    %c0_1 = arith.constant 0 : index
    %0 = vector.load %arg1[%c0, %c0_0, %c0_1] : memref<1x8x32xf32, #tpu.memory_space<vmem>>, vector<1x8x32xf32>
    %1 = vector.shape_cast %0 : vector<1x8x32xf32> to vector<8x32xf32>
    %2 = arith.truncf %1 : vector<8x32xf32> to vector<8x32xbf16>
    %c0_2 = arith.constant 0 : index
    %c0_3 = arith.constant 0 : index
    %3 = vector.load %arg2[%c0_2, %c0_3] : memref<32x64xbf16, #tpu.memory_space<vmem>>, vector<32x64xbf16>
    %cst = arith.constant dense<0.000000e+00> : vector<8x64xf32>
    %4 = tpu.matmul %2, %3, %cst {dimension_numbers = #tpu.dot_dimension_numbers<[1], [0], [0], [1], [0, 0, 1, 1], [], []>} : vector<8x32xbf16>, vector<32x64xbf16>, vector<8x64xf32> -> vector<8x64xf32>
    %c0_4 = arith.constant 0 : index
    %c0_5 = arith.constant 0 : index
    %5 = vector.load %arg3[%c0_4, %c0_5] : memref<1x64xf32, #tpu.memory_space<vmem>>, vector<1x64xf32>
    %6 = vector.broadcast %5 : vector<1x64xf32> to vector<8x64xf32>
    %7 = arith.addf %4, %6 : vector<8x64xf32>
    %cst_6 = arith.constant 0.000000e+00 : f32
    %8 = vector.broadcast %cst_6 : f32 to vector<8x64xf32>
    %9 = arith.maximumf %7, %8 : vector<8x64xf32>
    %10 = arith.truncf %9 : vector<8x64xf32> to vector<8x64xbf16>
    %c0_7 = arith.constant 0 : index
    %c0_8 = arith.constant 0 : index
    %11 = vector.load %arg4[%c0_7, %c0_8] : memref<64x32xbf16, #tpu.memory_space<vmem>>, vector<64x32xbf16>
    %cst_9 = arith.constant dense<0.000000e+00> : vector<8x32xf32>
    %12 = tpu.matmul %10, %11, %cst_9 {dimension_numbers = #tpu.dot_dimension_numbers<[1], [0], [0], [1], [0, 0, 1, 1], [], []>} : vector<8x64xbf16>, vector<64x32xbf16>, vector<8x32xf32> -> vector<8x32xf32>
    %c0_10 = arith.constant 0 : index
    %c0_11 = arith.constant 0 : index
    %13 = vector.load %arg5[%c0_10, %c0_11] : memref<1x32xf32, #tpu.memory_space<vmem>>, vector<1x32xf32>
    %14 = vector.broadcast %13 : vector<1x32xf32> to vector<8x32xf32>
    %15 = arith.addf %12, %14 : vector<8x32xf32>
    %cst_12 = arith.constant 0.000000e+00 : f32
    %16 = vector.broadcast %cst_12 : f32 to vector<8x32xf32>
    %17 = arith.maximumf %15, %16 : vector<8x32xf32>
    %c0_13 = arith.constant 0 : index
    %c0_14 = arith.constant 0 : index
    %18 = vector.load %arg6[%c0_13, %c0_14] : memref<1x32xf32, #tpu.memory_space<vmem>>, vector<1x32xf32>
    %cst_15 = arith.constant dense<0.000000e+00> : vector<1x8xf32>
    %19 = tpu.matmul %18, %17, %cst_15 {dimension_numbers = #tpu.dot_dimension_numbers<[1], [1], [0], [0], [0, 0, 1, 0], [], []>} : vector<1x32xf32>, vector<8x32xf32>, vector<1x8xf32> -> vector<1x8xf32>
    %c0_16 = arith.constant 0 : index
    %c0_17 = arith.constant 0 : index
    %20 = vector.load %arg7[%c0_16, %c0_17] : memref<1x1xf32, #tpu.memory_space<vmem>>, vector<1x1xf32>
    %21 = vector.broadcast %20 : vector<1x1xf32> to vector<1x8xf32>
    %22 = arith.addf %19, %21 : vector<1x8xf32>
    %cst_18 = arith.constant 0.000000e+00 : f32
    %23 = vector.broadcast %cst_18 : f32 to vector<1x8xf32>
    %24 = arith.subf %23, %22 : vector<1x8xf32>
    %25 = math.exp %24 : vector<1x8xf32>
    %cst_19 = arith.constant 1.000000e+00 : f32
    %26 = vector.broadcast %cst_19 : f32 to vector<1x8xf32>
    %27 = arith.addf %26, %25 : vector<1x8xf32>
    %28 = tpu.reciprocal %27 {approx = true} : vector<1x8xf32> -> vector<1x8xf32>
    %c0_20 = arith.constant 0 : index
    %c0_21 = arith.constant 0 : index
    %29 = vector.load %arg8[%c0_20, %c0_21] : memref<1x8xf32, #tpu.memory_space<vmem>>, vector<1x8xf32>
    tpu.vector_store %arg8[%c0_20, %c0_21], %28 {strides = array<i32>} : memref<1x8xf32, #tpu.memory_space<vmem>>, vector<1x8xf32>,
    return
  }
  func.func @transform_0(%arg0: i32) -> (i32, i32, i32) {
    %c0_i32 = arith.constant 0 : i32
    %c0_i32_0 = arith.constant 0 : i32
    %c0_i32_1 = arith.constant 0 : i32
    return %c0_i32, %arg0, %c0_i32_0 : i32, i32, i32
  }
  func.func @transform_1(%arg0: i32) -> (i32, i32) {
    %c0_i32 = arith.constant 0 : i32
    %c0_i32_0 = arith.constant 0 : i32
    %c0_i32_1 = arith.constant 0 : i32
    return %c0_i32, %c0_i32_0 : i32, i32
  }
  func.func @transform_2(%arg0: i32) -> (i32, i32) {
    %c0_i32 = arith.constant 0 : i32
    %c0_i32_0 = arith.constant 0 : i32
    %c0_i32_1 = arith.constant 0 : i32
    return %c0_i32, %c0_i32_0 : i32, i32
  }
  func.func @transform_3(%arg0: i32) -> (i32, i32) {
    %c0_i32 = arith.constant 0 : i32
    %c0_i32_0 = arith.constant 0 : i32
    %c0_i32_1 = arith.constant 0 : i32
    return %c0_i32, %c0_i32_0 : i32, i32
  }
  func.func @transform_4(%arg0: i32) -> (i32, i32) {
    %c0_i32 = arith.constant 0 : i32
    %c0_i32_0 = arith.constant 0 : i32
    %c0_i32_1 = arith.constant 0 : i32
    return %c0_i32, %c0_i32_0 : i32, i32
  }
  func.func @transform_5(%arg0: i32) -> (i32, i32) {
    %c0_i32 = arith.constant 0 : i32
    %c0_i32_0 = arith.constant 0 : i32
    %c0_i32_1 = arith.constant 0 : i32
    return %c0_i32, %c0_i32_0 : i32, i32
  }
  func.func @transform_6(%arg0: i32) -> (i32, i32) {
    %c0_i32 = arith.constant 0 : i32
    %c0_i32_0 = arith.constant 0 : i32
    %c0_i32_1 = arith.constant 0 : i32
    return %c0_i32, %c0_i32_0 : i32, i32
  }
  func.func @transform_7(%arg0: i32) -> (i32, i32) {
    %c0_i32 = arith.constant 0 : i32
    %c0_i32_0 = arith.constant 0 : i32
    return %arg0, %c0_i32 : i32, i32
  }
}

</mosaic_0001>

<llo_original>
// kernel: tpu_custom_call.1
$region0: #{tpu_custom_call.1}
  #allocation0 [shape = 'u32[]', space=smem, size = 0x4, offset = 0x4, fixed_abs, tag = 'smem constant byte address 0x4 - core index']
  #allocation1 [shape = 'u32[144,128]{1,0:T(1,128)}', space=vmem, size = 0x12000, scoped, tag = 'internal scratch']
  #allocation2 [shape = 'f32[1,1]{1,0:T(1,128)S(1)}', space=vmem, size = 0x200, scoped, tag = 'scoped memory for tpu_custom_call.1']
  %s0 = inlined_call_operand.vmem [shape: f32[2,8,32], index: 0, kind: input, shape index: {}]
  %s1 = inlined_call_operand.vmem [shape: bf16[32,64], index: 1, kind: input, shape index: {}]
  %s2 = inlined_call_operand.vmem [shape: f32[1,64], index: 2, kind: input, shape index: {}]
  %s3 = inlined_call_operand.vmem [shape: bf16[64,32], index: 3, kind: input, shape index: {}]
  %s4 = inlined_call_operand.vmem [shape: f32[1,32], index: 4, kind: input, shape index: {}]
  %s5 = inlined_call_operand.vmem [shape: f32[1,32], index: 5, kind: input, shape index: {}]
  %s6 = inlined_call_operand.<no memory space> [shape: f32[1,1], index: 6, kind: input, shape index: {}]
  %s7 = inlined_call_operand.hbm [shape: f32[1,8], index: 7, kind: output, shape index: {}]
  %s8 = sld [smem:[#allocation0]]
  $region38: #{tpu_custom_call.1} parent=0
    _
  %s10 = ssub.s32 1, %s8
  %s11 = scalar_select 0, %s10, %s8
  %v12 = vstv %s6
  %13 = vst [vmem:[#allocation2] sm:$0x1] %v12
  $region1: #{tpu_custom_call.1} parent=0
    #allocation3 [shape = 'u8[512]{0}', space=vmem, size = 0x400, scoped, tag = 'output window, operand 0, single buffered']
    #allocation4 [shape = 's32[1]{0}', space=sflag, size = 0x4, scoped, tag = 'scoped memory for tpu_custom_call.1']
    %14 = vsyncpa [#allocation4], 0
    // Predicated region
    $region2: #{tpu_custom_call.1} parent=1 // pred_check
      _
    $region3: #{tpu_custom_call.1} parent=1 // pred_check_branch
      %16 = sbr.rel (0) target = $region5
    $region4: #{tpu_custom_call.1} parent=1 // pred_region
      _
    $region5: #{tpu_custom_call.1} parent=1 // pred_fallthru
      _
    // Predicated region
    $region6: #{tpu_custom_call.1} parent=1 // pred_check
      _
    $region7: #{tpu_custom_call.1} parent=1 // pred_check_branch
      %18 = sbr.rel (0) target = $region9
    $region8: #{tpu_custom_call.1} parent=1 // pred_region
      _
    $region9: #{tpu_custom_call.1} parent=1 // pred_fallthru
      _
    // Predicated region
    $region10: #{tpu_custom_call.1} parent=1 // pred_check
      _
    $region11: #{tpu_custom_call.1} parent=1 // pred_check_branch
      %20 = sbr.rel (0) target = $region13
    $region12: #{tpu_custom_call.1} parent=1 // pred_region
      _
    $region13: #{tpu_custom_call.1} parent=1 // pred_fallthru
      _
    // Predicated region
    $region14: #{tpu_custom_call.1} parent=1 // pred_check
      _
    $region15: #{tpu_custom_call.1} parent=1 // pred_check_branch
      %22 = sbr.rel (0) target = $region17
    $region16: #{tpu_custom_call.1} parent=1 // pred_region
      _
    $region17: #{tpu_custom_call.1} parent=1 // pred_fallthru
      _
    // Predicated region
    $region18: #{tpu_custom_call.1} parent=1 // pred_check
      _
    $region19: #{tpu_custom_call.1} parent=1 // pred_check_branch
      %24 = sbr.rel (0) target = $region21
    $region20: #{tpu_custom_call.1} parent=1 // pred_region
      _
    $region21: #{tpu_custom_call.1} parent=1 // pred_fallthru
      _
    // Predicated region
    $region22: #{tpu_custom_call.1} parent=1 // pred_check
      _
    $region23: #{tpu_custom_call.1} parent=1 // pred_check_branch
      %26 = sbr.rel (0) target = $region25
    $region24: #{tpu_custom_call.1} parent=1 // pred_region
      _
    $region25: #{tpu_custom_call.1} parent=1 // pred_fallthru
      _
    // Predicated region
    $region26: #{tpu_custom_call.1} parent=1 // pred_check
      _
    $region27: #{tpu_custom_call.1} parent=1 // pred_check_branch
      %28 = sbr.rel (0) target = $region29
    $region28: #{tpu_custom_call.1} parent=1 // pred_region
      _
    $region29: #{tpu_custom_call.1} parent=1 // pred_fallthru
      _
    %v30 = vld [vmem:[%s0] sm:$0xff]
    %v31 = vpack.c.bf16 %v30, %v30
    %v32 = vld [vmem:[%s1] sm:$0xf]
    %v33 = vld [vmem:[%s1 + $0x4] sm:$0xf]
    %v34 = vld [vmem:[%s1 + $0x8] sm:$0xf]
    %v35 = vld [vmem:[%s1 + $0xc] sm:$0xf]
    %v36 = vld [vmem:[%s2] sm:$0x1]
    %v38 = vlaneseq
    %v39 = vshrl.u32 %v38, 7
    %v40 = vsub.s32 0, %v39
    %v41 = vrot.slane %v36, %v40
    %v47 = vunpack.c.l.b16 %v32
    %v48 = vunpack.c.l.b16 %v33
    %v49 = vunpack.c.l.b16 %v34
    %v50 = vunpack.c.l.b16 %v35
    %v51 = vpack.c.b16 %v48, %v47
    %v52 = vpack.c.b16 %v50, %v49
    %vm55 = vcmask 261120
    %v57 = vsel %vm55, %v31, 0
    %59 = vmatprep.subr.bf16.mxu0 0
    %60 = vmatpush1.bf16.msra.mxu0 0
    %61 = vmatprep.subr.bf16.mxu0 0
    %62 = vmatpush1.bf16.msra.mxu0 0
    %63 = vmatprep.subr.bf16.mxu0 0
    %64 = vmatpush1.bf16.msra.mxu0 0
    %65 = vmatprep.subr.bf16.mxu0 0
    %66 = vmatpush1.bf16.msra.mxu0 0
    %67 = vmatprep.subr.bf16.mxu0 0
    %68 = vmatpush1.bf16.msra.mxu0 0
    %69 = vmatprep.subr.bf16.mxu0 0
    %70 = vmatpush1.bf16.msra.mxu0 0
    %71 = vmatprep.subr.bf16.mxu0 0
    %72 = vmatpush1.bf16.msra.mxu0 %v52
    %73 = vmatprep.subr.bf16.mxu0 0
    %74 = vmatpush1.bf16.msra.mxu0 %v51
    %75 = vmatprep.subr.bf16.mxu0 0
    %76 = vmatpush2.bf16.msra.mxu0 0
    %77 = vmatprep.subr.bf16.mxu0 0
    %78 = vmatpush2.bf16.msra.mxu0 0
    %79 = vmatprep.subr.bf16.mxu0 0
    %80 = vmatpush2.bf16.msra.mxu0 0
    %81 = vmatprep.subr.bf16.mxu0 0
    %82 = vmatpush2.bf16.msra.mxu0 0
    %83 = vmatprep.subr.bf16.mxu0 0
    %84 = vmatpush2.bf16.msra.mxu0 0
    %85 = vmatprep.subr.bf16.mxu0 0
    %86 = vmatpush2.bf16.msra.mxu0 0
    %87 = vmatprep.subr.bf16.mxu0 0
    %88 = vmatpush2.bf16.msra.mxu0 0
    %89 = vmatprep.subr.bf16.mxu0 0
    %90 = vmatpush2.bf16.msra.mxu0 0
    %91 = vmatprep.mubr.bf16.mxu0 0
    %92 = vmatmul.mubr.bf16.gmra.mxu0 %v57
    %v93 = vpop.f32.mrf.mxu0
    %v94 = vadd.f32 %v41, %v93
    %v95 = vpop.f32.mrf.mxu0
    %v96 = vpop.f32.mrf.mxu0
    %v97 = vpop.f32.mrf.mxu0
    %98 = vdwg.mxu0
    %v99 = vmax.f32 %v94, 0.0
    %v100 = vpack.c.bf16 %v99, %v99
    %v101 = vld [vmem:[%s3] sm:$0xf]
    %v102 = vld [vmem:[%s3 + $0x4] sm:$0xf]
    %v103 = vld [vmem:[%s3 + $0x8] sm:$0xf]
    %v104 = vld [vmem:[%s3 + $0xc] sm:$0xf]
    %v105 = vld [vmem:[%s3 + $0x10] sm:$0xf]
    %v106 = vld [vmem:[%s3 + $0x14] sm:$0xf]
    %v107 = vld [vmem:[%s3 + $0x18] sm:$0xf]
    %v108 = vld [vmem:[%s3 + $0x1c] sm:$0xf]
    %v109 = vld [vmem:[%s4] sm:$0x1]
    %v111 = vlaneseq
    %v112 = vshrl.u32 %v111, 7
    %v113 = vsub.s32 0, %v112
    %v114 = vrot.slane %v109, %v113
    %v124 = vunpack.c.l.b16 %v101
    %v125 = vunpack.c.l.b16 %v102
    %v126 = vunpack.c.l.b16 %v103
    %v127 = vunpack.c.l.b16 %v104
    %v128 = vunpack.c.l.b16 %v105
    %v129 = vunpack.c.l.b16 %v106
    %v130 = vunpack.c.l.b16 %v107
    %v131 = vunpack.c.l.b16 %v108
    %v132 = vpack.c.b16 %v125, %v124
    %v133 = vpack.c.b16 %v127, %v126
    %v134 = vpack.c.b16 %v129, %v128
    %v135 = vpack.c.b16 %v131, %v130
    %vm140 = vcmask 523264
    %v142 = vsel %vm140, %v100, 0
    %144 = vmatprep.subr.bf16.mxu0 0
    %145 = vmatpush1.bf16.msra.mxu0 0
    %146 = vmatprep.subr.bf16.mxu0 0
    %147 = vmatpush1.bf16.msra.mxu0 0
    %148 = vmatprep.subr.bf16.mxu0 0
    %149 = vmatpush1.bf16.msra.mxu0 0
    %150 = vmatprep.subr.bf16.mxu0 0
    %151 = vmatpush1.bf16.msra.mxu0 0
    %152 = vmatprep.subr.bf16.mxu0 0
    %153 = vmatpush1.bf16.msra.mxu0 %v135
    %154 = vmatprep.subr.bf16.mxu0 0
    %155 = vmatpush1.bf16.msra.mxu0 %v134
    %156 = vmatprep.subr.bf16.mxu0 0
    %157 = vmatpush1.bf16.msra.mxu0 %v133
    %158 = vmatprep.subr.bf16.mxu0 0
    %159 = vmatpush1.bf16.msra.mxu0 %v132
    %160 = vmatprep.subr.bf16.mxu0 0
    %161 = vmatpush2.bf16.msra.mxu0 0
    %162 = vmatprep.subr.bf16.mxu0 0
    %163 = vmatpush2.bf16.msra.mxu0 0
    %164 = vmatprep.subr.bf16.mxu0 0
    %165 = vmatpush2.bf16.msra.mxu0 0
    %166 = vmatprep.subr.bf16.mxu0 0
    %167 = vmatpush2.bf16.msra.mxu0 0
    %168 = vmatprep.subr.bf16.mxu0 0
    %169 = vmatpush2.bf16.msra.mxu0 0
    %170 = vmatprep.subr.bf16.mxu0 0
    %171 = vmatpush2.bf16.msra.mxu0 0
    %172 = vmatprep.subr.bf16.mxu0 0
    %173 = vmatpush2.bf16.msra.mxu0 0
    %174 = vmatprep.subr.bf16.mxu0 0
    %175 = vmatpush2.bf16.msra.mxu0 0
    %176 = vmatprep.mubr.bf16.mxu0 0
    %177 = vmatmul.mubr.bf16.gmra.mxu0 %v142
    %v178 = vpop.f32.mrf.mxu0
    %v179 = vadd.f32 %v114, %v178
    %v180 = vpop.f32.mrf.mxu0
    %v181 = vpop.f32.mrf.mxu0
    %v182 = vpop.f32.mrf.mxu0
    %183 = vdwg.mxu0
    %v184 = vmax.f32 %v179, 0.0
    %v185 = vld [vmem:[%s5] sm:$0x1]
    %v186 = vld [vmem:[#allocation2] sm:$0x1]
    %188 = vset.pattern.permute.xlu0 0
    %189 = vperm.xlu0 %188, %v186
    %v190 = vpop.permute.xlu0 %189
    %v192 = vlaneseq
    %v193 = vshrl.u32 %v192, 7
    %v194 = vsub.s32 0, %v193
    %v195 = vrot.slane %v190, %v194
    %v197 = vsel %vm55, %v185, 0
    %v200 = vsel %vm55, %v184, 0
    %202 = vmatprep.subr.mxu0 0.0
    %203 = vmatpush1.xpose.msra.mxu0 0.0
    %204 = vmatprep.subr.mxu0 0.0
    %205 = vmatpush1.xpose.msra.mxu0 0.0
    %206 = vmatprep.subr.mxu0 0.0
    %207 = vmatpush1.xpose.msra.mxu0 0.0
    %208 = vmatprep.subr.mxu0 0.0
    %209 = vmatpush1.xpose.msra.mxu0 0.0
    %210 = vmatprep.subr.mxu0 0.0
    %211 = vmatpush1.xpose.msra.mxu0 0.0
    %212 = vmatprep.subr.mxu0 0.0
    %213 = vmatpush1.xpose.msra.mxu0 0.0
    %214 = vmatprep.subr.mxu0 0.0
    %215 = vmatpush1.xpose.msra.mxu0 0.0
    %216 = vmatprep.subr.mxu0 0.0
    %217 = vmatpush1.xpose.msra.mxu0 0.0
    %218 = vmatprep.subr.mxu0 0.0
    %219 = vmatpush1.xpose.msra.mxu0 0.0
    %220 = vmatprep.subr.mxu0 0.0
    %221 = vmatpush1.xpose.msra.mxu0 0.0
    %222 = vmatprep.subr.mxu0 0.0
    %223 = vmatpush1.xpose.msra.mxu0 0.0
    %224 = vmatprep.subr.mxu0 0.0
    %225 = vmatpush1.xpose.msra.mxu0 0.0
    %226 = vmatprep.subr.mxu0 0.0
    %227 = vmatpush1.xpose.msra.mxu0 0.0
    %228 = vmatprep.subr.mxu0 0.0
    %229 = vmatpush1.xpose.msra.mxu0 0.0
    %230 = vmatprep.subr.mxu0 0.0
    %231 = vmatpush1.xpose.msra.mxu0 0.0
    %232 = vmatprep.subr.mxu0 0.0
    %233 = vmatpush1.xpose.msra.mxu0 %v200
    %234 = vmatprep.subr.mxu0 0.0
    %235 = vmatpush2.xpose.msra.mxu0 0.0
    %236 = vmatprep.subr.mxu0 0.0
    %237 = vmatpush2.xpose.msra.mxu0 0.0
    %238 = vmatprep.subr.mxu0 0.0
    %239 = vmatpush2.xpose.msra.mxu0 0.0
    %240 = vmatprep.subr.mxu0 0.0
    %241 = vmatpush2.xpose.msra.mxu0 0.0
    %242 = vmatprep.subr.mxu0 0.0
    %243 = vmatpush2.xpose.msra.mxu0 0.0
    %244 = vmatprep.subr.mxu0 0.0
    %245 = vmatpush2.xpose.msra.mxu0 0.0
    %246 = vmatprep.subr.mxu0 0.0
    %247 = vmatpush2.xpose.msra.mxu0 0.0
    %248 = vmatprep.subr.mxu0 0.0
    %249 = vmatpush2.xpose.msra.mxu0 0.0
    %250 = vmatprep.subr.mxu0 0.0
    %251 = vmatpush2.xpose.msra.mxu0 0.0
    %252 = vmatprep.subr.mxu0 0.0
    %253 = vmatpush2.xpose.msra.mxu0 0.0
    %254 = vmatprep.subr.mxu0 0.0
    %255 = vmatpush2.xpose.msra.mxu0 0.0
    %256 = vmatprep.subr.mxu0 0.0
    %257 = vmatpush2.xpose.msra.mxu0 0.0
    %258 = vmatprep.subr.mxu0 0.0
    %259 = vmatpush2.xpose.msra.mxu0 0.0
    %260 = vmatprep.subr.mxu0 0.0
    %261 = vmatpush2.xpose.msra.mxu0 0.0
    %262 = vmatprep.subr.mxu0 0.0
    %263 = vmatpush2.xpose.msra.mxu0 0.0
    %264 = vmatprep.subr.mxu0 0.0
    %265 = vmatpush2.xpose.msra.mxu0 0.0
    %266 = vmatprep.mubr.f32.mxu0 0.0
    %267 = vmatmul.mubr.f32.gmra.mxu0 %v197
    %v268 = vpop.f32.mrf.mxu0
    %v269 = vadd.f32 %v195, %v268
    %v270 = vpop.f32.mrf.mxu0
    %271 = vdwg.mxu0
    %v272 = vsub.f32 0.0, %v269
    %v273 = vmul.f32 %v272, 1.442695
    %v274 = vpow.pop %v273
    %v275 = vadd.f32 %v274, 1.0
    %v276 = vrcp.pop %v275
    %vm277 = vcmask 57344
    %278 = vst.msk [vmem:[#allocation3] sm:$0x1] %vm277, %v276
    // Predicated region
    $region30: #{tpu_custom_call.1} parent=1 // pred_check
      _
    $region31: #{tpu_custom_call.1} parent=1 // pred_check_branch
      %280 = sbr.rel (0) target = $region33
    $region32: #{tpu_custom_call.1} parent=1 // pred_region
      %s282 = ssub.s32 16, 16
      %283 = vsyncadd [#allocation4], %s282
      %s285 = sshll.u32 [#allocation3], 4
      %s286 = int_to_ptr.vmem [resolvable:$true] %s285
      %288 = dma.vmem_to_hbm [thread:$0]  %s286, 16, %s7, [#allocation4]
    $region33: #{tpu_custom_call.1} parent=1 // pred_fallthru
      _
    // Predicated region
    $region34: #{tpu_custom_call.1} parent=1 // pred_check
      _
    $region35: #{tpu_custom_call.1} parent=1 // pred_check_branch
      %290 = sbr.rel (0) target = $region37
    $region36: #{tpu_custom_call.1} parent=1 // pred_region
      %291 = dma.done [#allocation4], 16
    $region37: #{tpu_custom_call.1} parent=1 // pred_fallthru
      _
    %292 = vsyncpa [#allocation4], 1

</llo_original>
